<compile_context>
chip_gen: v7x
topology: tpu7x:2x2x1
jax: 0.10.0
libtpu: 0.0.40
codegen_flags: <defaults>
</compile_context>

<pallas_src>
import jax
import jax.numpy as jnp
from jax.experimental import pallas as pl
from jax.experimental.pallas import tpu as pltpu

LANES = 128      # vreg lane width
SUBLANES = 8     # f32 sublanes per vreg
MAX_TILE_ROWS = 512  # ~512x128 f32 = 256 KiB per block; double-buffered in/out
                     # fits comfortably in scoped VMEM on v5e/v6e/v7x.


def _round_up(a: int, b: int) -> int:
    return ((a + b - 1) // b) * b


def _linear_kernel(x_ref, wb_ref, o_ref):
    # x_ref: [tile_rows, 128] VMEM block
    # wb_ref: [2] SMEM, wb_ref[0] = weight, wb_ref[1] = bias
    # o_ref: [tile_rows, 128] VMEM block
    w = wb_ref[0]
    b = wb_ref[1]
    o_ref[...] = x_ref[...] * w + b


def linear_forward(x, weight, bias, *, max_tile_rows: int = MAX_TILE_ROWS):
    """Linear(1, 1) forward: y = x * w + b. x: [..., 1] -> same shape."""
    # NOTE: for genuinely tiny inputs one would dispatch to plain XLA (x*w+b)
    # to skip pallas_call launch overhead; here we always take the Pallas path
    # so the kernel is exercised.
    orig_shape = x.shape
    total = int(x.size)

    # Lane-dense slab: pad flat length up to rows_padded * 128, where
    # rows_padded is a multiple of the row tile (itself a multiple of 8).
    rows = max(1, -(-total // LANES))
    tile_rows = min(max_tile_rows, _round_up(rows, SUBLANES))
    rows_padded = _round_up(rows, tile_rows)
    padded_total = rows_padded * LANES

    x_flat = x.reshape(-1)
    if padded_total > total:
        x_flat = jnp.pad(x_flat, (0, padded_total - total))
    x2d = x_flat.reshape(rows_padded, LANES)

    # Pack scalar params into one SMEM-resident array (no HBM broadcast).
    wb = jnp.concatenate([weight.reshape(-1), bias.reshape(-1)]).astype(x.dtype)

    grid = (rows_padded // tile_rows,)
    out2d = pl.pallas_call(
        _linear_kernel,
        out_shape=jax.ShapeDtypeStruct((rows_padded, LANES), x.dtype),
        grid=grid,
        in_specs=[
            pl.BlockSpec((tile_rows, LANES), lambda i: (i, 0)),  # x tiles (VMEM)
            pl.BlockSpec(memory_space=pltpu.SMEM),               # packed [w, b]
        ],
        out_specs=pl.BlockSpec((tile_rows, LANES), lambda i: (i, 0)),
        compiler_params=pltpu.CompilerParams(
            dimension_semantics=("parallel",),  # shard grid across TCs on v7x
        ),
    )(x2d, wb)

    # Drop padded tail and restore the original shape.
    y_flat = out2d.reshape(-1)[:total]
    return y_flat.reshape(orig_shape)


if __name__ == "__main__":
    key = jax.random.PRNGKey(0)
    kx, kw, kb, kx2 = jax.random.split(key, 4)

    # Deterministic parameter init (shapes from torch.nn.Linear(1, 1)).
    weight = jax.random.uniform(kw, (1, 1), jnp.float32, minval=-1.0, maxval=1.0)
    bias = jax.random.uniform(kb, (1,), jnp.float32, minval=-1.0, maxval=1.0)

    # Small example input consistent with Linear(1, 1): batch of 8 scalars.
    x = jax.random.normal(kx, (8, 1), jnp.float32)
    y = jax.block_until_ready(linear_forward(x, weight, bias))
    y_ref = x @ weight.T + bias
    assert y.shape == (8, 1)
    assert jnp.allclose(y, y_ref, atol=1e-6, rtol=1e-6)

    # Second check: non-multiple-of-128 batch with a small row tile so the
    # grid (> 1 step) and padded-tail slicing are exercised.
    x2 = jax.random.normal(kx2, (4101, 1), jnp.float32)
    y2 = jax.block_until_ready(linear_forward(x2, weight, bias, max_tile_rows=8))
    y2_ref = x2 @ weight.T + bias
    assert y2.shape == (4101, 1)
    assert jnp.allclose(y2, y2_ref, atol=1e-6, rtol=1e-6)

    print("KERNEL_OK")
</pallas_src>

<mosaic_0001>
module attributes {stable_mosaic.version = 11 : i64} {
  func.func @_linear_kernel(%arg0: i32, %arg1: memref<8x128xf32, #tpu.memory_space<vmem>>, %arg2: memref<2xf32, #tpu.memory_space<smem>>, %arg3: memref<8x128xf32, #tpu.memory_space<vmem>>) attributes {dimension_semantics = [#tpu.dimension_semantics<parallel>], iteration_bounds = array<i64: 1>, scalar_prefetch = 0 : i64, scratch_operands = 0 : i64, tpu.core_type = #tpu.core_type<tc>, window_params = [{transform_indices = @transform_0, window_bounds = array<i64: 8, 128>}, {transform_indices = @transform_1, window_bounds = array<i64: 2>}, {transform_indices = @transform_2, window_bounds = array<i64: 8, 128>}]} {
    %c0 = arith.constant 0 : index
    %0 = memref.load %arg2[%c0] : memref<2xf32, #tpu.memory_space<smem>>
    %c1 = arith.constant 1 : index
    %1 = memref.load %arg2[%c1] : memref<2xf32, #tpu.memory_space<smem>>
    %c0_0 = arith.constant 0 : index
    %c0_1 = arith.constant 0 : index
    %2 = vector.load %arg1[%c0_0, %c0_1] : memref<8x128xf32, #tpu.memory_space<vmem>>, vector<8x128xf32>
    %3 = vector.broadcast %0 : f32 to vector<8x128xf32>
    %4 = arith.mulf %2, %3 : vector<8x128xf32>
    %5 = vector.broadcast %1 : f32 to vector<8x128xf32>
    %6 = arith.addf %4, %5 : vector<8x128xf32>
    %c0_2 = arith.constant 0 : index
    %c0_3 = arith.constant 0 : index
    %7 = vector.load %arg3[%c0_2, %c0_3] : memref<8x128xf32, #tpu.memory_space<vmem>>, vector<8x128xf32>
    tpu.vector_store %arg3[%c0_2, %c0_3], %6 {strides = array<i32>} : memref<8x128xf32, #tpu.memory_space<vmem>>, vector<8x128xf32>,
    return
  }
  func.func @transform_0(%arg0: i32) -> (i32, i32) {
    %c0_i32 = arith.constant 0 : i32
    %c0_i32_0 = arith.constant 0 : i32
    return %arg0, %c0_i32 : i32, i32
  }
  func.func @transform_1(%arg0: i32) -> i32 {
    %c0_i32 = arith.constant 0 : i32
    %c0_i32_0 = arith.constant 0 : i32
    return %c0_i32 : i32
  }
  func.func @transform_2(%arg0: i32) -> (i32, i32) {
    %c0_i32 = arith.constant 0 : i32
    %c0_i32_0 = arith.constant 0 : i32
    return %arg0, %c0_i32 : i32, i32
  }
}

</mosaic_0001>

<llo_original>
// kernel: tpu_custom_call.1
$region0: #{tpu_custom_call.1}
  #allocation0 [shape = 'u32[]', space=smem, size = 0x4, offset = 0x4, fixed_abs, tag = 'smem constant byte address 0x4 - core index']
  #allocation1 [shape = 'u32[144,128]{1,0:T(1,128)}', space=vmem, size = 0x12000, scoped, tag = 'internal scratch']
  %s0 = inlined_call_operand.hbm [shape: f32[8,128], index: 0, kind: input, shape index: {}]
  %s1 = inlined_call_operand.vmem [shape: f32[2], index: 1, kind: input, shape index: {}]
  %s2 = inlined_call_operand.hbm [shape: f32[8,128], index: 2, kind: output, shape index: {}]
  %s3 = sld [smem:[#allocation0]]
  $region26: #{tpu_custom_call.1} parent=0
    _
  %s5 = ssub.s32 1, %s3
  %s6 = scalar_select 0, %s5, %s3
  $region1: #{tpu_custom_call.1} parent=0
    #allocation2 [shape = 'u8[4096]{0}', space=vmem, size = 0x1000, scoped, tag = 'input window, operand 0, single buffered']
    #allocation3 [shape = 's32[1]{0}', space=sflag, size = 0x4, scoped, tag = 'scoped memory for tpu_custom_call.1']
    #allocation4 [shape = 's32[1]{0}', space=sflag, size = 0x4, scoped, tag = 'scoped memory for tpu_custom_call.1']
    #allocation5 [shape = 's32[1]{0}', space=sflag, size = 0x4, scoped, tag = 'scoped memory for tpu_custom_call.1']
    #allocation6 [shape = 'u8[512]{0}', space=smem, size = 0x200, scoped, tag = 'input window, operand 1, single buffered']
    #allocation7 [shape = 'u8[4096]{0}', space=vmem, size = 0x1000, scoped, tag = 'output window, operand 0, single buffered']
    %7 = vsyncpa [#allocation3], 0
    %8 = vsyncpa [#allocation5], 0
    %9 = vsyncpa [#allocation4], 0
    // Predicated region
    $region2: #{tpu_custom_call.1} parent=1 // pred_check
      _
    $region3: #{tpu_custom_call.1} parent=1 // pred_check_branch
      %11 = sbr.rel (0) target = $region5
    $region4: #{tpu_custom_call.1} parent=1 // pred_region
      %s13 = ssub.s32 128, 128
      %14 = vsyncadd [#allocation3], %s13
      %s16 = sshll.u32 [#allocation2], 4
      %s17 = int_to_ptr.vmem [resolvable:$true] %s16
      %19 = dma.hbm_to_vmem [thread:$0]  %s0, 128, %s17, [#allocation3]
    $region5: #{tpu_custom_call.1} parent=1 // pred_fallthru
      _
    // Predicated region
    $region6: #{tpu_custom_call.1} parent=1 // pred_check
      _
    $region7: #{tpu_custom_call.1} parent=1 // pred_check_branch
      %21 = sbr.rel (0) target = $region9
    $region8: #{tpu_custom_call.1} parent=1 // pred_region
      %s23 = ssub.s32 16, 16
      %24 = vsyncadd [#allocation5], %s23
      %s26 = sshll.u32 %s1, 4
      %s27 = int_to_ptr.vmem [resolvable:$true] %s26
      %29 = dma.vmem_to_smem %s27, 16, [#allocation6], [#allocation5]
    $region9: #{tpu_custom_call.1} parent=1 // pred_fallthru
      _
    // Predicated region
    $region10: #{tpu_custom_call.1} parent=1 // pred_check
      _
    $region11: #{tpu_custom_call.1} parent=1 // pred_check_branch
      %31 = sbr.rel (0) target = $region13
    $region12: #{tpu_custom_call.1} parent=1 // pred_region
      %32 = dma.done [#allocation3], 128
    $region13: #{tpu_custom_call.1} parent=1 // pred_fallthru
      _
    // Predicated region
    $region14: #{tpu_custom_call.1} parent=1 // pred_check
      _
    $region15: #{tpu_custom_call.1} parent=1 // pred_check_branch
      %34 = sbr.rel (0) target = $region17
    $region16: #{tpu_custom_call.1} parent=1 // pred_region
      %35 = dma.done [#allocation5], 16
    $region17: #{tpu_custom_call.1} parent=1 // pred_fallthru
      _
    %36 = sfence
    %s37 = sld [smem:[#allocation6]]
    %s38 = sld [smem:[#allocation6 + $0x1]]
    %v39 = vld [vmem:[#allocation2] sm:$0xff]
    %v40 = vstv %s37
    %v41 = vmul.f32 %v39, %v40
    %v42 = vstv %s38
    %v43 = vadd.f32 %v41, %v42
    %44 = vst [vmem:[#allocation7] sm:$0xff] %v43
    // Predicated region
    $region18: #{tpu_custom_call.1} parent=1 // pred_check
      _
    $region19: #{tpu_custom_call.1} parent=1 // pred_check_branch
      %46 = sbr.rel (0) target = $region21
    $region20: #{tpu_custom_call.1} parent=1 // pred_region
      %s48 = ssub.s32 128, 128
      %49 = vsyncadd [#allocation4], %s48
      %s51 = sshll.u32 [#allocation7], 4
      %s52 = int_to_ptr.vmem [resolvable:$true] %s51
      %54 = dma.vmem_to_hbm [thread:$0]  %s52, 128, %s2, [#allocation4]
    $region21: #{tpu_custom_call.1} parent=1 // pred_fallthru
      _
    // Predicated region
    $region22: #{tpu_custom_call.1} parent=1 // pred_check
      _
    $region23: #{tpu_custom_call.1} parent=1 // pred_check_branch
      %56 = sbr.rel (0) target = $region25
    $region24: #{tpu_custom_call.1} parent=1 // pred_region
      %57 = dma.done [#allocation4], 128
    $region25: #{tpu_custom_call.1} parent=1 // pred_fallthru
      _
    %58 = vsyncpa [#allocation3], 1
    %59 = vsyncpa [#allocation4], 1
    %60 = vsyncpa [#allocation5], 1

</llo_original>
